<compile_context>
chip_gen: v7x
topology: tpu7x:2x2x1
jax: 0.10.0
libtpu: 0.0.40
codegen_flags: <defaults>
</compile_context>

<pallas_src>
import functools

import jax
import jax.numpy as jnp
from jax import lax
from jax.experimental import pallas as pl
from jax.experimental.pallas import tpu as pltpu

_LANES = 128


def _pool_kernel(x_ref, psum_ref, pmax_ref, sum_acc, max_acc, *,
                 S, S_TILE, n_tiles, tiles_per_split, n_split):
    """Partial (sum, max) channel pooling for one (batch, spatial-split).

    x_ref    : (1, C, S_TILE) block of x in its native dtype.
    psum_ref : (1, 1, C, 1) f32 partial channel sums for this (batch, split).
    pmax_ref : (1, 1, C, 1) f32 partial channel maxes.
    sum_acc  : (C, 128) f32 scratch   (lane-folded running sum).
    max_acc  : (C, 128) scratch in the max-accumulation dtype (running max).
    """
    p = pl.program_id(1)                    # spatial split (dual-TC axis)
    s = pl.program_id(2)                    # spatial tile within the split
    tile = p * tiles_per_split + s          # global spatial tile index
    C = x_ref.shape[1]

    @pl.when(s == 0)
    def _init():
        sum_acc[...] = jnp.zeros(sum_acc.shape, sum_acc.dtype)
        max_acc[...] = jnp.full(max_acc.shape, -jnp.inf, max_acc.dtype)

    def accumulate(valid_lanes):
        # `valid_lanes` is a *static* Python int (== S_TILE for a full tile),
        # so per-chunk masking / skipping decisions are made at trace time.
        sum_part = jnp.zeros((C, _LANES), jnp.float32)
        max_part = jnp.full((C, _LANES), -jnp.inf, max_acc.dtype)
        for i in range(S_TILE // _LANES):
            lo = i * _LANES
            if lo >= valid_lanes:
                break                                   # fully past valid range
            # Lane-aligned chunk load straight from the VMEM block (1 vld/vreg).
            c = x_ref[0, :, lo:lo + _LANES].astype(max_acc.dtype)   # (C, 128)
            if lo + _LANES > valid_lanes:
                # Only the boundary chunk of the ragged last tile pays the mask.
                lane = lax.broadcasted_iota(jnp.int32, c.shape, 1)
                ok = lane < (valid_lanes - lo)
                c_sum = jnp.where(ok, c, jnp.zeros((), c.dtype))
                c_max = jnp.where(ok, c, jnp.array(-jnp.inf, c.dtype))
            else:
                c_sum = c
                c_max = c
            sum_part = sum_part + c_sum.astype(jnp.float32)   # f32 accumulation
            max_part = jnp.maximum(max_part, c_max)           # native-dtype max
        sum_acc[...] = sum_acc[...] + sum_part
        max_acc[...] = jnp.maximum(max_acc[...], max_part)

    ragged = (S % S_TILE) != 0                       # static
    has_oob = (tiles_per_split * n_split) > n_tiles  # static (split padding)
    tail = S - (n_tiles - 1) * S_TILE                # static valid lanes, last tile

    if not ragged and not has_oob:
        accumulate(S_TILE)                           # fast path, no gating
    else:
        @pl.when(tile < n_tiles - 1)
        def _full_tiles():
            accumulate(S_TILE)

        @pl.when(tile == n_tiles - 1)
        def _last_tile():
            accumulate(tail if ragged else S_TILE)
        # tile > n_tiles - 1 (only when has_oob): contributes nothing.

    @pl.when(s == tiles_per_split - 1)
    def _finalize():
        # Single XLU lane-collapse per (batch, split).
        psum_ref[0, 0] = jnp.sum(sum_acc[...], axis=1, keepdims=True)
        pmax_ref[0, 0] = jnp.max(max_acc[...].astype(jnp.float32),
                                 axis=1, keepdims=True)


def _se_epilogue_kernel(psum_ref, pmax_ref, w1_ref, w2_ref, o_ref, *, S):
    """Combine split partials, divide by true S, fc1->ReLU->fc2->(+)->sigmoid."""
    w1 = w1_ref[...].astype(jnp.float32)              # (hidden, C)
    w2 = w2_ref[...].astype(jnp.float32)              # (C, hidden)
    B, n_split = psum_ref.shape[0], psum_ref.shape[1]
    inv_S = 1.0 / S
    for b in range(B):                                # static unrolled; tiny work
        ssum = psum_ref[b, 0]                         # (C, 1) f32
        smax = pmax_ref[b, 0]
        for p in range(1, n_split):
            ssum = ssum + psum_ref[b, p]
            smax = jnp.maximum(smax, pmax_ref[b, p])
        pooled = jnp.concatenate([ssum * inv_S, smax], axis=1)        # (C, 2)
        h = jnp.dot(w1, pooled, preferred_element_type=jnp.float32)   # (hid, 2)
        h = jnp.maximum(h, 0.0)
        out = jnp.dot(w2, h, preferred_element_type=jnp.float32)      # (C, 2)
        gate = jax.nn.sigmoid(out[:, 0:1] + out[:, 1:2])              # (C, 1)
        o_ref[b] = gate.astype(o_ref.dtype)


def channel_attention(x_ncdhw, w1, w2, *, s_tile=None,
                      max_block_bytes=4 * 1024 * 1024,
                      n_split=None, input_buffers=2):
    """x_ncdhw: (B, C, D, H, W); w1: (C//r, C); w2: (C, C//r).

    Returns sigmoid channel gates of shape (B, C, 1, 1, 1), matching PyTorch.
    """
    B, C, D, H, W = x_ncdhw.shape
    S = D * H * W
    hidden = w1.shape[0]
    assert w1.shape == (hidden, C) and w2.shape == (C, hidden)

    # Free contiguous view (no HBM copy): NCDHW -> (B, C, S).
    x_bcs = x_ncdhw.reshape(B, C, S)

    itemsize = jnp.dtype(x_bcs.dtype).itemsize
    if s_tile is None:
        # Largest 128-lane-multiple tile under the per-block byte budget; with
        # the small (C, 128) accumulators a 4 MiB block double-buffers safely
        # under every chip's scoped-VMEM default (v5e 16 MiB, v6e/v7x 32 MiB).
        s_cap = max(_LANES, (max_block_bytes // (C * itemsize)) // _LANES * _LANES)
        s_tile = min(s_cap, pl.cdiv(S, _LANES) * _LANES)
    else:
        s_tile = pl.cdiv(s_tile, _LANES) * _LANES    # keep 128-lane aligned
    n_tiles = pl.cdiv(S, s_tile)

    if n_split is None:
        # v7x has two TensorCores; batch is the only other parallel axis, so
        # for B == 1 split the spatial reduction two ways to keep both busy.
        n_split = 2 if (B == 1 and n_tiles >= 2) else 1
    n_split = max(1, min(n_split, n_tiles))
    tiles_per_split = pl.cdiv(n_tiles, n_split)

    # Max path stays in the native dtype for bf16/f32 (bf16 VALU on v6e/v7x);
    # anything else is upcast to f32.  Sums always accumulate in f32.
    if jnp.dtype(x_bcs.dtype) in (jnp.dtype(jnp.bfloat16), jnp.dtype(jnp.float32)):
        max_acc_dtype = x_bcs.dtype
    else:
        max_acc_dtype = jnp.float32

    kernel = functools.partial(
        _pool_kernel, S=S, S_TILE=s_tile, n_tiles=n_tiles,
        tiles_per_split=tiles_per_split, n_split=n_split)

    def x_index_map(b, p, s):
        # Clamp so split tiles that fall past the end of S still map to a valid
        # block (their contribution is skipped inside the kernel).
        return (b, 0, jnp.minimum(p * tiles_per_split + s, n_tiles - 1))

    # Optional deeper input pipelining (v7x sweep knob); off by default.
    x_spec_kwargs = {}
    if input_buffers > 2 and hasattr(pl, "Buffered"):
        x_spec_kwargs["pipeline_mode"] = pl.Buffered(input_buffers)
    try:
        x_spec = pl.BlockSpec((1, C, s_tile), x_index_map, **x_spec_kwargs)
    except TypeError:
        x_spec = pl.BlockSpec((1, C, s_tile), x_index_map)

    part_spec = pl.BlockSpec((1, 1, C, 1), lambda b, p, s: (b, p, 0, 0))
    part_shape = jax.ShapeDtypeStruct((B, n_split, C, 1), jnp.float32)

    block_bytes = C * s_tile * itemsize
    vmem_limit = max(32 * 1024 * 1024,
                     max(2, input_buffers) * block_bytes + (8 << 20))

    psum, pmax = pl.pallas_call(
        kernel,
        out_shape=(part_shape, part_shape),
        grid_spec=pltpu.PrefetchScalarGridSpec(
            num_scalar_prefetch=0,
            grid=(B, n_split, tiles_per_split),
            in_specs=[x_spec],
            out_specs=(part_spec, part_spec),
            scratch_shapes=[
                pltpu.VMEM((C, _LANES), jnp.float32),    # lane-folded running sum
                pltpu.VMEM((C, _LANES), max_acc_dtype),  # lane-folded running max
            ],
        ),
        compiler_params=pltpu.CompilerParams(
            dimension_semantics=("parallel", "parallel", "arbitrary"),
            vmem_limit_bytes=int(vmem_limit)),
    )(x_bcs)

    # Tiny epilogue: combine split partials + fc1/ReLU/fc2/sigmoid (O(B*C) work).
    gates = pl.pallas_call(
        functools.partial(_se_epilogue_kernel, S=S),
        out_shape=jax.ShapeDtypeStruct((B, C, 1), jnp.float32),
    )(psum, pmax, w1, w2)

    return gates.reshape(B, C, 1, 1, 1)


def channel_attention_ref(x, w1, w2):
    # Pure-JAX reference mirroring the PyTorch forward.
    avg = jnp.mean(x, axis=(2, 3, 4))                 # (B, C)
    mx = jnp.max(x, axis=(2, 3, 4))                   # (B, C)

    def branch(p):
        h = jnp.maximum(p @ w1.T, 0.0)                # (B, C//r)
        return h @ w2.T                               # (B, C)

    out = jax.nn.sigmoid(branch(avg) + branch(mx))
    return out[:, :, None, None, None]


if __name__ == "__main__":
    key = jax.random.PRNGKey(0)
    kx, k1, k2, kx2, kx3 = jax.random.split(key, 5)

    B, C, D, H, W = 2, 64, 4, 8, 8       # S = 256
    ratio = 16
    hidden = C // ratio                   # 4

    x = jax.random.normal(kx, (B, C, D, H, W), dtype=jnp.float32)
    # Weights as in Conv3d(C, C//r, 1, bias=False) / Conv3d(C//r, C, 1, bias=False)
    # with the trailing 1x1x1 squeezed.
    w1 = jax.random.normal(k1, (hidden, C), dtype=jnp.float32) * 0.1
    w2 = jax.random.normal(k2, (C, hidden), dtype=jnp.float32) * 0.1

    # Case 1: S a multiple of the lane width (single full tile per batch).
    y = jax.block_until_ready(channel_attention(x, w1, w2))
    y_ref = channel_attention_ref(x, w1, w2)
    assert y.shape == (B, C, 1, 1, 1)
    assert jnp.allclose(y, y_ref, atol=1e-5, rtol=1e-5)

    # Case 2: tiled + ragged spatial reduction (S = 315, s_tile = 128).
    D2, H2, W2 = 5, 9, 7
    x2 = jax.random.normal(kx2, (B, C, D2, H2, W2), dtype=jnp.float32)
    y2 = jax.block_until_ready(channel_attention(x2, w1, w2, s_tile=128))
    y2_ref = channel_attention_ref(x2, w1, w2)
    assert jnp.allclose(y2, y2_ref, atol=1e-5, rtol=1e-5)

    # Case 3: B == 1 -> 2-way spatial split on the second parallel grid axis
    # (dual-TensorCore path on v7x); exercises clamped/out-of-range split tiles.
    x3 = jax.random.normal(kx3, (1, C, D2, H2, W2), dtype=jnp.float32)
    y3 = jax.block_until_ready(channel_attention(x3, w1, w2, s_tile=128))
    y3_ref = channel_attention_ref(x3, w1, w2)
    assert jnp.allclose(y3, y3_ref, atol=1e-5, rtol=1e-5)

    # Case 4: bf16 input (max path stays bf16; sum accumulates in f32).
    x4 = x2.astype(jnp.bfloat16)
    y4 = jax.block_until_ready(channel_attention(x4, w1, w2))
    y4_ref = channel_attention_ref(x4.astype(jnp.float32), w1, w2)
    assert jnp.allclose(y4, y4_ref, atol=1e-3, rtol=1e-3)

    print("KERNEL_OK")
</pallas_src>

<mosaic_0001>
module attributes {stable_mosaic.version = 11 : i64} {
  func.func @_pool_kernel(%arg0: i32, %arg1: i32, %arg2: i32, %arg3: memref<1x64x256xf32, #tpu.memory_space<vmem>>, %arg4: memref<1x1x64x1xf32, #tpu.memory_space<vmem>>, %arg5: memref<1x1x64x1xf32, #tpu.memory_space<vmem>>, %arg6: memref<64x128xf32, #tpu.memory_space<vmem>>, %arg7: memref<64x128xf32, #tpu.memory_space<vmem>>) attributes {dimension_semantics = [#tpu.dimension_semantics<parallel>, #tpu.dimension_semantics<parallel>, #tpu.dimension_semantics<arbitrary>], iteration_bounds = array<i64: 2, 1, 1>, scalar_prefetch = 0 : i64, scratch_operands = 2 : i64, tpu.core_type = #tpu.core_type<tc>, window_params = [{transform_indices = @transform_0, window_bounds = array<i64: 1, 64, 256>}, {transform_indices = @transform_1, window_bounds = array<i64: 1, 1, 64, 1>}, {transform_indices = @transform_2, window_bounds = array<i64: 1, 1, 64, 1>}]} {
    %c0_i32 = arith.constant 0 : i32
    %0 = arith.cmpi eq, %arg2, %c0_i32 : i32
    %1 = arith.extui %0 : i1 to i32
    %c0_i32_0 = arith.constant 0 : i32
    %2 = arith.cmpi ne, %1, %c0_i32_0 : i32
    scf.if %2 {
      %cst_16 = arith.constant 0.000000e+00 : f32
      %22 = vector.broadcast %cst_16 : f32 to vector<64x128xf32>
      %c0_17 = arith.constant 0 : index
      %c0_18 = arith.constant 0 : index
      %23 = vector.load %arg6[%c0_17, %c0_18] : memref<64x128xf32, #tpu.memory_space<vmem>>, vector<64x128xf32>
      tpu.vector_store %arg6[%c0_17, %c0_18], %22 {strides = array<i32>} : memref<64x128xf32, #tpu.memory_space<vmem>>, vector<64x128xf32>,
      %cst_19 = arith.constant 0xFF800000 : f32
      %24 = vector.broadcast %cst_19 : f32 to vector<64x128xf32>
      %c0_20 = arith.constant 0 : index
      %c0_21 = arith.constant 0 : index
      %25 = vector.load %arg7[%c0_20, %c0_21] : memref<64x128xf32, #tpu.memory_space<vmem>>, vector<64x128xf32>
      tpu.vector_store %arg7[%c0_20, %c0_21], %24 {strides = array<i32>} : memref<64x128xf32, #tpu.memory_space<vmem>>, vector<64x128xf32>,
    } else {
    }
    %cst = arith.constant 0.000000e+00 : f32
    %3 = vector.broadcast %cst : f32 to vector<64x128xf32>
    %cst_1 = arith.constant 0xFF800000 : f32
    %4 = vector.broadcast %cst_1 : f32 to vector<64x128xf32>
    %c0 = arith.constant 0 : index
    %c0_2 = arith.constant 0 : index
    %c0_3 = arith.constant 0 : index
    %5 = vector.load %arg3[%c0, %c0_2, %c0_3] : memref<1x64x256xf32, #tpu.memory_space<vmem>>, vector<1x64x128xf32>
    %6 = vector.shape_cast %5 : vector<1x64x128xf32> to vector<64x128xf32>
    %7 = arith.addf %3, %6 : vector<64x128xf32>
    %8 = arith.maximumf %4, %6 : vector<64x128xf32>
    %c0_4 = arith.constant 0 : index
    %c0_5 = arith.constant 0 : index
    %c128 = arith.constant 128 : index
    %9 = vector.load %arg3[%c0_4, %c0_5, %c128] : memref<1x64x256xf32, #tpu.memory_space<vmem>>, vector<1x64x128xf32>
    %10 = vector.shape_cast %9 : vector<1x64x128xf32> to vector<64x128xf32>
    %11 = arith.addf %7, %10 : vector<64x128xf32>
    %12 = arith.maximumf %8, %10 : vector<64x128xf32>
    %c0_6 = arith.constant 0 : index
    %c0_7 = arith.constant 0 : index
    %13 = vector.load %arg6[%c0_6, %c0_7] : memref<64x128xf32, #tpu.memory_space<vmem>>, vector<64x128xf32>
    %14 = arith.addf %13, %11 : vector<64x128xf32>
    %c0_8 = arith.constant 0 : index
    %c0_9 = arith.constant 0 : index
    %15 = vector.load %arg6[%c0_8, %c0_9] : memref<64x128xf32, #tpu.memory_space<vmem>>, vector<64x128xf32>
    tpu.vector_store %arg6[%c0_8, %c0_9], %14 {strides = array<i32>} : memref<64x128xf32, #tpu.memory_space<vmem>>, vector<64x128xf32>,
    %c0_10 = arith.constant 0 : index
    %c0_11 = arith.constant 0 : index
    %16 = vector.load %arg7[%c0_10, %c0_11] : memref<64x128xf32, #tpu.memory_space<vmem>>, vector<64x128xf32>
    %17 = arith.maximumf %16, %12 : vector<64x128xf32>
    %c0_12 = arith.constant 0 : index
    %c0_13 = arith.constant 0 : index
    %18 = vector.load %arg7[%c0_12, %c0_13] : memref<64x128xf32, #tpu.memory_space<vmem>>, vector<64x128xf32>
    tpu.vector_store %arg7[%c0_12, %c0_13], %17 {strides = array<i32>} : memref<64x128xf32, #tpu.memory_space<vmem>>, vector<64x128xf32>,
    %c0_i32_14 = arith.constant 0 : i32
    %19 = arith.cmpi eq, %arg2, %c0_i32_14 : i32
    %20 = arith.extui %19 : i1 to i32
    %c0_i32_15 = arith.constant 0 : i32
    %21 = arith.cmpi ne, %20, %c0_i32_15 : i32
    scf.if %21 {
      %c0_16 = arith.constant 0 : index
      %c0_17 = arith.constant 0 : index
      %22 = vector.load %arg6[%c0_16, %c0_17] : memref<64x128xf32, #tpu.memory_space<vmem>>, vector<64x128xf32>
      %cst_18 = arith.constant dense<0.000000e+00> : vector<64xf32>
      %23 = vector.multi_reduction <add>, %22, %cst_18 [1] : vector<64x128xf32> to vector<64xf32>
      %24 = vector.shape_cast %23 : vector<64xf32> to vector<64x1xf32>
      %c0_19 = arith.constant 0 : index
      %c0_20 = arith.constant 0 : index
      %c0_21 = arith.constant 0 : index
      %c0_22 = arith.constant 0 : index
      %25 = vector.load %arg4[%c0_19, %c0_20, %c0_21, %c0_22] : memref<1x1x64x1xf32, #tpu.memory_space<vmem>>, vector<1x1x64x1xf32>
      %26 = vector.shape_cast %25 : vector<1x1x64x1xf32> to vector<64x1xf32>
      %27 = vector.shape_cast %24 : vector<64x1xf32> to vector<1x1x64x1xf32>
      tpu.vector_store %arg4[%c0_19, %c0_20, %c0_21, %c0_22], %27 {strides = array<i32>} : memref<1x1x64x1xf32, #tpu.memory_space<vmem>>, vector<1x1x64x1xf32>,
      %c0_23 = arith.constant 0 : index
      %c0_24 = arith.constant 0 : index
      %28 = vector.load %arg7[%c0_23, %c0_24] : memref<64x128xf32, #tpu.memory_space<vmem>>, vector<64x128xf32>
      %cst_25 = arith.constant dense<0xFF800000> : vector<64xf32>
      %29 = vector.multi_reduction <maximumf>, %28, %cst_25 [1] : vector<64x128xf32> to vector<64xf32>
      %30 = vector.shape_cast %29 : vector<64xf32> to vector<64x1xf32>
      %c0_26 = arith.constant 0 : index
      %c0_27 = arith.constant 0 : index
      %c0_28 = arith.constant 0 : index
      %c0_29 = arith.constant 0 : index
      %31 = vector.load %arg5[%c0_26, %c0_27, %c0_28, %c0_29] : memref<1x1x64x1xf32, #tpu.memory_space<vmem>>, vector<1x1x64x1xf32>
      %32 = vector.shape_cast %31 : vector<1x1x64x1xf32> to vector<64x1xf32>
      %33 = vector.shape_cast %30 : vector<64x1xf32> to vector<1x1x64x1xf32>
      tpu.vector_store %arg5[%c0_26, %c0_27, %c0_28, %c0_29], %33 {strides = array<i32>} : memref<1x1x64x1xf32, #tpu.memory_space<vmem>>, vector<1x1x64x1xf32>,
    } else {
    }
    return
  }
  func.func @transform_0(%arg0: i32, %arg1: i32, %arg2: i32) -> (i32, i32, i32) {
    %c1_i32 = arith.constant 1 : i32
    %0 = arith.muli %arg1, %c1_i32 : i32
    %1 = arith.addi %0, %arg2 : i32
    %c0_i32 = arith.constant 0 : i32
    %2 = arith.minsi %1, %c0_i32 : i32
    %c0_i32_0 = arith.constant 0 : i32
    %c0_i32_1 = arith.constant 0 : i32
    return %arg0, %c0_i32_0, %2 : i32, i32, i32
  }
  func.func @transform_1(%arg0: i32, %arg1: i32, %arg2: i32) -> (i32, i32, i32, i32) {
    %c0_i32 = arith.constant 0 : i32
    %c0_i32_0 = arith.constant 0 : i32
    %c0_i32_1 = arith.constant 0 : i32
    return %arg0, %arg1, %c0_i32, %c0_i32_0 : i32, i32, i32, i32
  }
  func.func @transform_2(%arg0: i32, %arg1: i32, %arg2: i32) -> (i32, i32, i32, i32) {
    %c0_i32 = arith.constant 0 : i32
    %c0_i32_0 = arith.constant 0 : i32
    %c0_i32_1 = arith.constant 0 : i32
    return %arg0, %arg1, %c0_i32, %c0_i32_0 : i32, i32, i32, i32
  }
}

</mosaic_0001>

<llo_original>
// kernel: tpu_custom_call.1
$region0: #{tpu_custom_call.1}
  #allocation0 [shape = 'u32[]', space=smem, size = 0x4, offset = 0x4, fixed_abs, tag = 'smem constant byte address 0x4 - core index']
  #allocation1 [shape = 'u32[144,128]{1,0:T(1,128)}', space=vmem, size = 0x12000, scoped, tag = 'internal scratch']
  #allocation2 [shape = 'f32[64,128]{1,0:T(8,128)}', space=vmem, size = 0x8000, scoped, tag = 'scratch operand']
  #allocation3 [shape = 'f32[64,128]{1,0:T(8,128)}', space=vmem, size = 0x8000, scoped, tag = 'scratch operand']
  %s0 = inlined_call_operand.hbm [shape: f32[2,64,256], index: 0, kind: input, shape index: {}]
  %s1 = inlined_call_operand.vmem [shape: f32[2,1,64,1], index: 1, kind: output, shape index: {0}]
  %s2 = inlined_call_operand.vmem [shape: f32[2,1,64,1], index: 2, kind: output, shape index: {1}]
  %3 = xla_tuple %s1, %s2
  %s4 = sld [smem:[#allocation0]]
  $region57: #{tpu_custom_call.1} parent=0
    _
  %s6 = ssub.s32 1, %s4
  %s7 = scalar_select 0, %s6, %s4
  $region1: #{tpu_custom_call.1} parent=0
    #allocation4 [shape = 'u8[131072]{0}', space=vmem, size = 0x20000, scoped, tag = 'input window, operand 0']
    #allocation5 [shape = 's32[2]{0}', space=sflag, size = 0x8, scoped, tag = 'scoped memory for tpu_custom_call.1']
    %8 = vsyncpa [#allocation5], 0
    %s9 = scalar_lea.sflag [#allocation5], 1
    %10 = vsyncpa %s9, 0
    loop: start=0, step=1, limit=4
    $region2: #{tpu_custom_call.1} parent=1 // loop_pre_header
      _
    $region3: #{tpu_custom_call.1} parent=1 // loop_header
      %s12 = sphi 0, %s16
      %p13 = scmp.ge.s32.totalorder %s12, 4
      %s19 = sphi 0, %s38
      %s20 = sphi 0, %s34
      %s21 = sphi 0, %s30
      %s22 = sphi 0, %s19
      %s23 = sphi 0, %s20
      %s24 = sphi 0, %s21
      %s25 = sphi 0, %s22
      %s26 = sphi 0, %s23
      %s27 = sphi 0, %s24
      %s49 = sphi 0, %s51
      %s52 = sphi 0, %s49
      %s53 = sphi 0, %s52
      %s69 = sphi 0, %s53
      %s77 = sphi 0, %s79
      %s80 = sphi 0, %s77
      %s81 = sphi 0, %s80
      %s97 = sphi 0, %s81
      %s105 = sphi 0, %s107
      %s108 = sphi 0, %s105
      %s109 = sphi 0, %s108
      %s125 = sphi 0, %s109
    $region4: #{tpu_custom_call.1} parent=1 // loop_header_branch
      %15 = sbr.rel (%p13) target = $region8
    $region5: #{tpu_custom_call.1} parent=1 // loop_body
      %s17 = ssub.s32 %s12, 1
      %s18 = ssub.s32 %s12, 2
      %s28 = sadd.s32 1, %s21
      %p29 = scmp.ge.s32.totalorder %s28, 1
      %s30 = scalar_select %p29, 0, %s28
      %s31 = sadd.s32 1, %s20
      %s32 = scalar_select %p29, %s31, %s20
      %p33 = scmp.ge.s32.totalorder %s32, 1
      %s34 = scalar_select %p33, 0, %s32
      %s35 = sadd.s32 1, %s19
      %s36 = scalar_select %p33, %s35, %s19
      %p37 = scmp.ge.s32.totalorder %s36, 2
      %s38 = scalar_select %p37, 0, %s36
      %s39 = sadd.s32 %s20, %s21
      %p40 = scmp.lt.s32.totalorder %s39, 0
      %s41 = scalar_select %p40, %s39, 0
      %s42 = sadd.s32 %s34, %s30
      %p43 = scmp.lt.s32.totalorder %s42, 0
      %s44 = scalar_select %p43, %s42, 0
      %s45 = ssub.s32 %s19, %s38
      %s46 = ssub.s32 %s41, %s44
      %s47 = sor.u32 %s45, %s46
      %p48 = scmp.eq.s32.totalorder %s47, 0
      %s50 = sadd.s32 %s49, 1
      %s51 = scalar_select %p48, %s49, %s50
      %p54 = pneg %p48
      %p55 = scmp.eq.s32.totalorder %s12, 1
      %p56 = por %p54, %p55
      %p57 = scmp.ne.s32.totalorder %s49, %s52
      %p58 = scmp.eq.s32.totalorder %s12, 0
      %p59 = por %p57, %p58
      %p60 = scmp.ne.s32.totalorder %s49, %s52
      %p61 = scmp.eq.s32.totalorder %s17, 1
      %p62 = por %p60, %p61
      %p63 = scmp.ne.s32.totalorder %s52, %s53
      %p64 = scmp.eq.s32.totalorder %s17, 0
      %p65 = por %p63, %p64
      %p66 = scmp.ne.s32.totalorder %s52, %s53
      %p67 = scmp.eq.s32.totalorder %s18, 1
      %p68 = por %p66, %p67
      %p70 = scmp.ne.s32.totalorder %s53, %s69
      %p71 = scmp.eq.s32.totalorder %s18, 0
      %p72 = por %p70, %p71
      %s73 = ssub.s32 %s19, %s38
      %s74 = ssub.s32 %s20, %s34
      %s75 = sor.u32 %s73, %s74
      %p76 = scmp.eq.s32.totalorder %s75, 0
      %s78 = sadd.s32 %s77, 1
      %s79 = scalar_select %p76, %s77, %s78
      %p82 = pneg %p76
      %p83 = scmp.eq.s32.totalorder %s12, 1
      %p84 = por %p82, %p83
      %p85 = scmp.ne.s32.totalorder %s77, %s80
      %p86 = scmp.eq.s32.totalorder %s12, 0
      %p87 = por %p85, %p86
      %p88 = scmp.ne.s32.totalorder %s77, %s80
      %p89 = scmp.eq.s32.totalorder %s17, 1
      %p90 = por %p88, %p89
      %p91 = scmp.ne.s32.totalorder %s80, %s81
      %p92 = scmp.eq.s32.totalorder %s17, 0
      %p93 = por %p91, %p92
      %p94 = scmp.ne.s32.totalorder %s80, %s81
      %p95 = scmp.eq.s32.totalorder %s18, 1
      %p96 = por %p94, %p95
      %p98 = scmp.ne.s32.totalorder %s81, %s97
      %p99 = scmp.eq.s32.totalorder %s18, 0
      %p100 = por %p98, %p99
      %s101 = ssub.s32 %s19, %s38
      %s102 = ssub.s32 %s20, %s34
      %s103 = sor.u32 %s101, %s102
      %p104 = scmp.eq.s32.totalorder %s103, 0
      %s106 = sadd.s32 %s105, 1
      %s107 = scalar_select %p104, %s105, %s106
      %p110 = pneg %p104
      %p111 = scmp.eq.s32.totalorder %s12, 1
      %p112 = por %p110, %p111
      %p113 = scmp.ne.s32.totalorder %s105, %s108
      %p114 = scmp.eq.s32.totalorder %s12, 0
      %p115 = por %p113, %p114
      %p116 = scmp.ne.s32.totalorder %s105, %s108
      %p117 = scmp.eq.s32.totalorder %s17, 1
      %p118 = por %p116, %p117
      %p119 = scmp.ne.s32.totalorder %s108, %s109
      %p120 = scmp.eq.s32.totalorder %s17, 0
      %p121 = por %p119, %p120
      %p122 = scmp.ne.s32.totalorder %s108, %s109
      %p123 = scmp.eq.s32.totalorder %s18, 1
      %p124 = por %p122, %p123
      %p126 = scmp.ne.s32.totalorder %s109, %s125
      %p127 = scmp.eq.s32.totalorder %s18, 0
      %p128 = por %p126, %p127
      %p129 = scmp.le.s32.totalorder 1, %s12
      %p130 = scmp.lt.s32.totalorder %s12, 3
      %p131 = pnand %p129, %p130
      %p132 = pneg %p131
      // Predicated region
      $region9: #{tpu_custom_call.1} parent=5 // pred_check
        _
      $region10: #{tpu_custom_call.1} parent=5 // pred_check_branch
        %134 = sbr.rel (%p131) target = $region12
      $region11: #{tpu_custom_call.1} parent=5 // pred_region
        %s135 = ssub.s32 %s12, 1
      $region12: #{tpu_custom_call.1} parent=5 // pred_fallthru
        _
      %p136 = scmp.lt.s32.totalorder %s12, 2
      // Predicated region
      $region13: #{tpu_custom_call.1} parent=5 // pred_check
        %p137 = pneg %p136
      $region14: #{tpu_custom_call.1} parent=5 // pred_check_branch
        %139 = sbr.rel (%p137) target = $region16
      $region15: #{tpu_custom_call.1} parent=5 // pred_region
        // Predicated region
        $region17: #{tpu_custom_call.1} parent=15 // pred_check
          %p140 = pneg %p59
        $region18: #{tpu_custom_call.1} parent=15 // pred_check_branch
          %142 = sbr.rel (%p140) target = $region20
        $region19: #{tpu_custom_call.1} parent=15 // pred_region
          %s143 = sand.u32 %s49, 1
          %s144 = scalar_lea.sflag [#allocation5], %s143
          %s145 = sand.u32 %s49, 1
          %s146 = smul.addr %s145, 128
          %s147 = scalar_lea.vmem [#allocation4], %s146
          %s148 = sadd.s32 %s20, %s21
          %p149 = scmp.lt.s32.totalorder %s148, 0
          %s150 = scalar_select %p149, %s148, 0
          %s151 = smul.u32 2, %s150
          %s153 = ssub.s32 2048, 2048
          %154 = vsyncadd %s144, %s153
          %s155 = smul.addr %s19, 16
          %s156 = sadd.s32 %s151, %s155
          %s157 = smul.addr %s156, 128
          %s158 = scalar_lea.hbm %s0, %s157
          %s159 = sshll.u32 %s147, 4
          %s160 = int_to_ptr.vmem [resolvable:$true] %s159
          %165 = dma.hbm_to_vmem [thread:$0]  %s158, 2048, %s160, %s144, 256, 256, 16
        $region20: #{tpu_custom_call.1} parent=15 // pred_fallthru
          _
      $region16: #{tpu_custom_call.1} parent=5 // pred_fallthru
        _
      %p166 = scmp.le.s32.totalorder 1, %s12
      %p167 = scmp.lt.s32.totalorder %s12, 3
      %p168 = pnand %p166, %p167
      %p169 = pneg %p168
      // Predicated region
      $region21: #{tpu_custom_call.1} parent=5 // pred_check
        _
      $region22: #{tpu_custom_call.1} parent=5 // pred_check_branch
        %171 = sbr.rel (%p168) target = $region24
      $region23: #{tpu_custom_call.1} parent=5 // pred_region
        %s172 = ssub.s32 %s12, 1
        %s173 = sand.u32 %s52, 1
        %s174 = scalar_lea.sflag [#allocation5], %s173
        %s175 = sand.u32 %s52, 1
        %s176 = smul.addr %s175, 128
        %s177 = scalar_lea.vmem [#allocation4], %s176
        // Predicated region
        $region25: #{tpu_custom_call.1} parent=23 // pred_check
          %p178 = pneg %p65
        $region26: #{tpu_custom_call.1} parent=23 // pred_check_branch
          %180 = sbr.rel (%p178) target = $region28
        $region27: #{tpu_custom_call.1} parent=23 // pred_region
          %181 = dma.done %s174, 2048
        $region28: #{tpu_custom_call.1} parent=23 // pred_fallthru
          _
        %s182 = sand.u32 %s52, 1
        %s183 = scalar_lea.sflag [#allocation5], %s182
        %s184 = sand.u32 %s52, 1
        %s185 = smul.addr %s184, 128
        %s186 = scalar_lea.vmem [#allocation4], %s185
        %p187 = pneg %p65
        %p188 = pneg %p62
        %p189 = pneg %p93
        %p190 = pneg %p90
        %p191 = scmp.lt.s32.totalorder %s22, 1
        %s192 = scalar_select %p191, %s22, 1
        %p193 = scmp.lt.s32.totalorder %s23, 0
        %s194 = scalar_select %p193, %s23, 0
        %s195 = smul.addr %s194, 8
        %s196 = smul.addr %s192, 8
        %s197 = sadd.s32 %s195, %s196
        %s198 = smul.addr %s197, 8
        %s199 = scalar_lea.vmem %s1, %s198
        %p200 = pneg %p121
        %p201 = pneg %p118
        %p202 = scmp.lt.s32.totalorder %s22, 1
        %s203 = scalar_select %p202, %s22, 1
        %p204 = scmp.lt.s32.totalorder %s23, 0
        %s205 = scalar_select %p204, %s23, 0
        %s206 = smul.addr %s205, 8
        %s207 = smul.addr %s203, 8
        %s208 = sadd.s32 %s206, %s207
        %s209 = smul.addr %s208, 8
        %s210 = scalar_lea.vmem %s2, %s209
        %s211 = sadd.s32 %s23, %s24
        %p212 = scmp.lt.s32.totalorder %s211, 0
        %s213 = scalar_select %p212, %s211, 0
        %s214 = smul.u32 2, %s213
        %p215 = scmp.lt.s32.totalorder %s22, 1
        %s216 = scalar_select %p215, %s22, 1
        %p217 = scmp.lt.s32.totalorder %s23, 0
        %s218 = scalar_select %p217, %s23, 0
        %s219 = smul.addr %s218, 8
        %s220 = smul.addr %s216, 8
        %s221 = sadd.s32 %s219, %s220
        %s222 = smul.addr %s221, 8
        %s223 = scalar_lea.vmem %s1, %s222
        %p224 = scmp.lt.s32.totalorder %s22, 1
        %s225 = scalar_select %p224, %s22, 1
        %p226 = scmp.lt.s32.totalorder %s23, 0
        %s227 = scalar_select %p226, %s23, 0
        %s228 = smul.addr %s227, 8
        %s229 = smul.addr %s225, 8
        %s230 = sadd.s32 %s228, %s229
        %s231 = smul.addr %s230, 8
        %s232 = scalar_lea.vmem %s2, %s231
        %p233 = scmp.eq.s32.totalorder %s24, 0
        // Predicated region
        $region29: #{tpu_custom_call.1} parent=23 // pred_check
          %p234 = pneg %p233
        $region30: #{tpu_custom_call.1} parent=23 // pred_check_branch
          %236 = sbr.rel (%p234) target = $region32
        $region31: #{tpu_custom_call.1} parent=23 // pred_region
          %237 = vst [vmem:[#allocation2] sm:$0xff] 0.0
          %238 = vst [vmem:[#allocation2 + $0x8] sm:$0xff] 0.0
          %239 = vst [vmem:[#allocation2 + $0x10] sm:$0xff] 0.0
          %240 = vst [vmem:[#allocation2 + $0x18] sm:$0xff] 0.0
          %241 = vst [vmem:[#allocation2 + $0x20] sm:$0xff] 0.0
          %242 = vst [vmem:[#allocation2 + $0x28] sm:$0xff] 0.0
          %243 = vst [vmem:[#allocation2 + $0x30] sm:$0xff] 0.0
          %244 = vst [vmem:[#allocation2 + $0x38] sm:$0xff] 0.0
          %245 = vst [vmem:[#allocation3] sm:$0xff] -inf
          %246 = vst [vmem:[#allocation3 + $0x8] sm:$0xff] -inf
          %247 = vst [vmem:[#allocation3 + $0x10] sm:$0xff] -inf
          %248 = vst [vmem:[#allocation3 + $0x18] sm:$0xff] -inf
          %249 = vst [vmem:[#allocation3 + $0x20] sm:$0xff] -inf
          %250 = vst [vmem:[#allocation3 + $0x28] sm:$0xff] -inf
          %251 = vst [vmem:[#allocation3 + $0x30] sm:$0xff] -inf
          %252 = vst [vmem:[#allocation3 + $0x38] sm:$0xff] -inf
        $region32: #{tpu_custom_call.1} parent=23 // pred_fallthru
          _
        %v253 = vld [vmem:[%s177] sm:$0xff]
        %v254 = vld [vmem:[%s177 + $0x10] sm:$0xff]
        %v255 = vld [vmem:[%s177 + $0x20] sm:$0xff]
        %v256 = vld [vmem:[%s177 + $0x30] sm:$0xff]
        %v257 = vld [vmem:[%s177 + $0x40] sm:$0xff]
        %v258 = vld [vmem:[%s177 + $0x50] sm:$0xff]
        %v259 = vld [vmem:[%s177 + $0x60] sm:$0xff]
        %v260 = vld [vmem:[%s177 + $0x70] sm:$0xff]
        %v261 = vadd.f32 %v253, 0.0
        %v262 = vadd.f32 %v254, 0.0
        %v263 = vadd.f32 %v255, 0.0
        %v264 = vadd.f32 %v256, 0.0
        %v265 = vadd.f32 %v257, 0.0
        %v266 = vadd.f32 %v258, 0.0
        %v267 = vadd.f32 %v259, 0.0
        %v268 = vadd.f32 %v260, 0.0
        %v269 = vld [vmem:[%s177 + $0x8] sm:$0xff]
        %v270 = vld [vmem:[%s177 + $0x18] sm:$0xff]
        %v271 = vld [vmem:[%s177 + $0x28] sm:$0xff]
        %v272 = vld [vmem:[%s177 + $0x38] sm:$0xff]
        %v273 = vld [vmem:[%s177 + $0x48] sm:$0xff]
        %v274 = vld [vmem:[%s177 + $0x58] sm:$0xff]
        %v275 = vld [vmem:[%s177 + $0x68] sm:$0xff]
        %v276 = vld [vmem:[%s177 + $0x78] sm:$0xff]
        %v277 = vadd.f32 %v261, %v269
        %v278 = vadd.f32 %v262, %v270
        %v279 = vadd.f32 %v263, %v271
        %v280 = vadd.f32 %v264, %v272
        %v281 = vadd.f32 %v265, %v273
        %v282 = vadd.f32 %v266, %v274
        %v283 = vadd.f32 %v267, %v275
        %v284 = vadd.f32 %v268, %v276
        %v285 = vmax.f32 %v253, %v269
        %v286 = vmax.f32 %v254, %v270
        %v287 = vmax.f32 %v255, %v271
        %v288 = vmax.f32 %v256, %v272
        %v289 = vmax.f32 %v257, %v273
        %v290 = vmax.f32 %v258, %v274
        %v291 = vmax.f32 %v259, %v275
        %v292 = vmax.f32 %v260, %v276
        %v293 = vld [vmem:[#allocation2] sm:$0xff]
        %v294 = vld [vmem:[#allocation2 + $0x8] sm:$0xff]
        %v295 = vld [vmem:[#allocation2 + $0x10] sm:$0xff]
        %v296 = vld [vmem:[#allocation2 + $0x18] sm:$0xff]
        %v297 = vld [vmem:[#allocation2 + $0x20] sm:$0xff]
        %v298 = vld [vmem:[#allocation2 + $0x28] sm:$0xff]
        %v299 = vld [vmem:[#allocation2 + $0x30] sm:$0xff]
        %v300 = vld [vmem:[#allocation2 + $0x38] sm:$0xff]
        %v301 = vadd.f32 %v293, %v277
        %v302 = vadd.f32 %v294, %v278
        %v303 = vadd.f32 %v295, %v279
        %v304 = vadd.f32 %v296, %v280
        %v305 = vadd.f32 %v297, %v281
        %v306 = vadd.f32 %v298, %v282
        %v307 = vadd.f32 %v299, %v283
        %v308 = vadd.f32 %v300, %v284
        %309 = vst [vmem:[#allocation2] sm:$0xff] %v301
        %310 = vst [vmem:[#allocation2 + $0x8] sm:$0xff] %v302
        %311 = vst [vmem:[#allocation2 + $0x10] sm:$0xff] %v303
        %312 = vst [vmem:[#allocation2 + $0x18] sm:$0xff] %v304
        %313 = vst [vmem:[#allocation2 + $0x20] sm:$0xff] %v305
        %314 = vst [vmem:[#allocation2 + $0x28] sm:$0xff] %v306
        %315 = vst [vmem:[#allocation2 + $0x30] sm:$0xff] %v307
        %316 = vst [vmem:[#allocation2 + $0x38] sm:$0xff] %v308
        %v317 = vld [vmem:[#allocation3] sm:$0xff]
        %v318 = vld [vmem:[#allocation3 + $0x8] sm:$0xff]
        %v319 = vld [vmem:[#allocation3 + $0x10] sm:$0xff]
        %v320 = vld [vmem:[#allocation3 + $0x18] sm:$0xff]
        %v321 = vld [vmem:[#allocation3 + $0x20] sm:$0xff]
        %v322 = vld [vmem:[#allocation3 + $0x28] sm:$0xff]
        %v323 = vld [vmem:[#allocation3 + $0x30] sm:$0xff]
        %v324 = vld [vmem:[#allocation3 + $0x38] sm:$0xff]
        %v325 = vmax.f32 %v317, %v285
        %v326 = vmax.f32 %v318, %v286
        %v327 = vmax.f32 %v319, %v287
        %v328 = vmax.f32 %v320, %v288
        %v329 = vmax.f32 %v321, %v289
        %v330 = vmax.f32 %v322, %v290
        %v331 = vmax.f32 %v323, %v291
        %v332 = vmax.f32 %v324, %v292
        %333 = vst [vmem:[#allocation3] sm:$0xff] %v325
        %334 = vst [vmem:[#allocation3 + $0x8] sm:$0xff] %v326
        %335 = vst [vmem:[#allocation3 + $0x10] sm:$0xff] %v327
        %336 = vst [vmem:[#allocation3 + $0x18] sm:$0xff] %v328
        %337 = vst [vmem:[#allocation3 + $0x20] sm:$0xff] %v329
        %338 = vst [vmem:[#allocation3 + $0x28] sm:$0xff] %v330
        %339 = vst [vmem:[#allocation3 + $0x30] sm:$0xff] %v331
        %340 = vst [vmem:[#allocation3 + $0x38] sm:$0xff] %v332
        // Predicated region
        $region33: #{tpu_custom_call.1} parent=23 // pred_check
          %p341 = pneg %p233
        $region34: #{tpu_custom_call.1} parent=23 // pred_check_branch
          %343 = sbr.rel (%p341) target = $region36
        $region35: #{tpu_custom_call.1} parent=23 // pred_region
          %v344 = vld [vmem:[#allocation2] sm:$0xff]
          %v345 = vld [vmem:[#allocation2 + $0x8] sm:$0xff]
          %v346 = vld [vmem:[#allocation2 + $0x10] sm:$0xff]
          %v347 = vld [vmem:[#allocation2 + $0x18] sm:$0xff]
          %v348 = vld [vmem:[#allocation2 + $0x20] sm:$0xff]
          %v349 = vld [vmem:[#allocation2 + $0x28] sm:$0xff]
          %v350 = vld [vmem:[#allocation2 + $0x30] sm:$0xff]
          %v351 = vld [vmem:[#allocation2 + $0x38] sm:$0xff]
          %352 = vadd.xlane.f32.xlu0 %v344
          %v353 = vpop.xlane.xlu0 %352
          %354 = vadd.xlane.f32.xlu0 %v345
          %v355 = vpop.xlane.xlu0 %354
          %356 = vadd.xlane.f32.xlu0 %v346
          %v357 = vpop.xlane.xlu0 %356
          %358 = vadd.xlane.f32.xlu0 %v347
          %v359 = vpop.xlane.xlu0 %358
          %360 = vadd.xlane.f32.xlu0 %v348
          %v361 = vpop.xlane.xlu0 %360
          %362 = vadd.xlane.f32.xlu0 %v349
          %v363 = vpop.xlane.xlu0 %362
          %364 = vadd.xlane.f32.xlu0 %v350
          %v365 = vpop.xlane.xlu0 %364
          %366 = vadd.xlane.f32.xlu0 %v351
          %v367 = vpop.xlane.xlu0 %366
          %vm368 = vcmask 7168
          %369 = vst.msk [vmem:[%s223] sm:$0xff] %vm368, %v353
          %370 = vst.msk [vmem:[%s223 + $0x8] sm:$0xff] %vm368, %v355
          %371 = vst.msk [vmem:[%s223 + $0x10] sm:$0xff] %vm368, %v357
          %372 = vst.msk [vmem:[%s223 + $0x18] sm:$0xff] %vm368, %v359
          %373 = vst.msk [vmem:[%s223 + $0x20] sm:$0xff] %vm368, %v361
          %374 = vst.msk [vmem:[%s223 + $0x28] sm:$0xff] %vm368, %v363
          %375 = vst.msk [vmem:[%s223 + $0x30] sm:$0xff] %vm368, %v365
          %376 = vst.msk [vmem:[%s223 + $0x38] sm:$0xff] %vm368, %v367
          %v377 = vld [vmem:[#allocation3] sm:$0xff]
          %v378 = vld [vmem:[#allocation3 + $0x8] sm:$0xff]
          %v379 = vld [vmem:[#allocation3 + $0x10] sm:$0xff]
          %v380 = vld [vmem:[#allocation3 + $0x18] sm:$0xff]
          %v381 = vld [vmem:[#allocation3 + $0x20] sm:$0xff]
          %v382 = vld [vmem:[#allocation3 + $0x28] sm:$0xff]
          %v383 = vld [vmem:[#allocation3 + $0x30] sm:$0xff]
          %v384 = vld [vmem:[#allocation3 + $0x38] sm:$0xff]
          %385 = vmax.xlane.f32.xlu0 %v377
          %v386 = vpop.xlane.xlu0 %385
          %387 = vmax.xlane.f32.xlu0 %v378
          %v388 = vpop.xlane.xlu0 %387
          %389 = vmax.xlane.f32.xlu0 %v379
          %v390 = vpop.xlane.xlu0 %389
          %391 = vmax.xlane.f32.xlu0 %v380
          %v392 = vpop.xlane.xlu0 %391
          %393 = vmax.xlane.f32.xlu0 %v381
          %v394 = vpop.xlane.xlu0 %393
          %395 = vmax.xlane.f32.xlu0 %v382
          %v396 = vpop.xlane.xlu0 %395
          %397 = vmax.xlane.f32.xlu0 %v383
          %v398 = vpop.xlane.xlu0 %397
          %399 = vmax.xlane.f32.xlu0 %v384
          %v400 = vpop.xlane.xlu0 %399
          %401 = vst.msk [vmem:[%s232] sm:$0xff] %vm368, %v386
          %402 = vst.msk [vmem:[%s232 + $0x8] sm:$0xff] %vm368, %v388
          %403 = vst.msk [vmem:[%s232 + $0x10] sm:$0xff] %vm368, %v390
          %404 = vst.msk [vmem:[%s232 + $0x18] sm:$0xff] %vm368, %v392
          %405 = vst.msk [vmem:[%s232 + $0x20] sm:$0xff] %vm368, %v394
          %406 = vst.msk [vmem:[%s232 + $0x28] sm:$0xff] %vm368, %v396
          %407 = vst.msk [vmem:[%s232 + $0x30] sm:$0xff] %vm368, %v398
          %408 = vst.msk [vmem:[%s232 + $0x38] sm:$0xff] %vm368, %v400
        $region36: #{tpu_custom_call.1} parent=23 // pred_fallthru
          _
        %p409 = scmp.lt.s32.totalorder %s22, 1
        %s410 = scalar_select %p409, %s22, 1
        %p411 = scmp.lt.s32.totalorder %s23, 0
        %s412 = scalar_select %p411, %s23, 0
        %s413 = smul.addr %s412, 8
        %s414 = smul.addr %s410, 8
        %s415 = sadd.s32 %s413, %s414
        %s416 = smul.addr %s415, 8
        %s417 = scalar_lea.vmem %s1, %s416
        %p418 = scmp.lt.s32.totalorder %s22, 1
        %s419 = scalar_select %p418, %s22, 1
        %p420 = scmp.lt.s32.totalorder %s23, 0
        %s421 = scalar_select %p420, %s23, 0
        %s422 = smul.addr %s421, 8
        %s423 = smul.addr %s419, 8
        %s424 = sadd.s32 %s422, %s423
        %s425 = smul.addr %s424, 8
        %s426 = scalar_lea.vmem %s2, %s425
        // Predicated region
        $region37: #{tpu_custom_call.1} parent=23 // pred_check
          %p427 = pneg %p90
        $region38: #{tpu_custom_call.1} parent=23 // pred_check_branch
          %429 = sbr.rel (%p427) target = $region40
        $region39: #{tpu_custom_call.1} parent=23 // pred_region
          _
        $region40: #{tpu_custom_call.1} parent=23 // pred_fallthru
          _
        // Predicated region
        $region41: #{tpu_custom_call.1} parent=23 // pred_check
          %p430 = pneg %p118
        $region42: #{tpu_custom_call.1} parent=23 // pred_check_branch
          %432 = sbr.rel (%p430) target = $region44
        $region43: #{tpu_custom_call.1} parent=23 // pred_region
          _
        $region44: #{tpu_custom_call.1} parent=23 // pred_fallthru
          _
      $region24: #{tpu_custom_call.1} parent=5 // pred_fallthru
        _
      %p433 = scmp.le.s32.totalorder 2, %s12
      // Predicated region
      $region45: #{tpu_custom_call.1} parent=5 // pred_check
        %p434 = pneg %p433
      $region46: #{tpu_custom_call.1} parent=5 // pred_check_branch
        %436 = sbr.rel (%p434) target = $region48
      $region47: #{tpu_custom_call.1} parent=5 // pred_region
        %s437 = ssub.s32 %s12, 2
        // Predicated region
        $region49: #{tpu_custom_call.1} parent=47 // pred_check
          %p438 = pneg %p96
        $region50: #{tpu_custom_call.1} parent=47 // pred_check_branch
          %440 = sbr.rel (%p438) target = $region52
        $region51: #{tpu_custom_call.1} parent=47 // pred_region
          %p441 = scmp.lt.s32.totalorder %s25, 1
          %s442 = scalar_select %p441, %s25, 1
          %p443 = scmp.lt.s32.totalorder %s26, 0
          %s444 = scalar_select %p443, %s26, 0
          %s445 = smul.addr %s444, 8
          %s446 = smul.addr %s442, 8
          %s447 = sadd.s32 %s445, %s446
          %s448 = smul.addr %s447, 8
          %s449 = scalar_lea.vmem %s1, %s448
        $region52: #{tpu_custom_call.1} parent=47 // pred_fallthru
          _
        // Predicated region
        $region53: #{tpu_custom_call.1} parent=47 // pred_check
          %p450 = pneg %p124
        $region54: #{tpu_custom_call.1} parent=47 // pred_check_branch
          %452 = sbr.rel (%p450) target = $region56
        $region55: #{tpu_custom_call.1} parent=47 // pred_region
          %p453 = scmp.lt.s32.totalorder %s25, 1
          %s454 = scalar_select %p453, %s25, 1
          %p455 = scmp.lt.s32.totalorder %s26, 0
          %s456 = scalar_select %p455, %s26, 0
          %s457 = smul.addr %s456, 8
          %s458 = smul.addr %s454, 8
          %s459 = sadd.s32 %s457, %s458
          %s460 = smul.addr %s459, 8
          %s461 = scalar_lea.vmem %s2, %s460
        $region56: #{tpu_custom_call.1} parent=47 // pred_fallthru
          _
      $region48: #{tpu_custom_call.1} parent=5 // pred_fallthru
        _
    $region6: #{tpu_custom_call.1} parent=1 // loop_footer
      %s16 = sadd.s32 1, %s12
    $region7: #{tpu_custom_call.1} parent=1 // loop_footer_branch
      %11 = sbr.rel target = $region3
    $region8: #{tpu_custom_call.1} parent=1 // loop_exit
      _
    %462 = vsyncpa [#allocation5], 1
    %s463 = scalar_lea.sflag [#allocation5], 1
    %464 = vsyncpa %s463, 1

</llo_original>
